<compile_context>
chip_gen: v6e
topology: v6e:2x2x1
jax: 0.10.0
libtpu: 0.0.40
codegen_flags: <defaults>
</compile_context>

<pallas_src>
import functools

import jax
import jax.numpy as jnp
from jax.experimental import pallas as pl
from jax.experimental.pallas import tpu as pltpu


_LANE = 128
_SUBLANE = 8
_VMEM_LIMIT = 32 * 1024 * 1024          # safe on v5e/v6e (128 MiB) and v7x (64 MiB physical)
_NO_GRID_BYTES = 8 * 1024 * 1024        # whole-problem VMEM cap for the single-call path
_NO_GRID_MAX_BATCH = 512                # above this, prefer the grid so v7x's 2 TCs share work
_RESIDENT_WEIGHT_BYTES = 12 * 1024 * 1024  # weight-stationary plan only if weights fit easily


# ----------------------------------------------------------------------------
# Kernels
# ----------------------------------------------------------------------------
def _mlp_kernel(x_ref, w1_ref, b1_ref, w2_ref, b2_ref, o_ref):
    """Fused MLP: matmul -> bias -> relu -> matmul -> bias.

    Operands arrive pre-cast (bf16 matmul inputs, f32 biases), so the DMA already moved
    the narrow dtype; the only in-kernel cast is h before the second dot.  Both matmuls
    accumulate in f32 on the MXU; bias + relu run in f32 on the VPU.
    """
    h = jnp.dot(x_ref[...], w1_ref[...], preferred_element_type=jnp.float32) + b1_ref[...]
    h = jnp.maximum(h, 0.0).astype(w2_ref.dtype)
    y = jnp.dot(h, w2_ref[...], preferred_element_type=jnp.float32) + b2_ref[...]
    o_ref[...] = y.astype(o_ref.dtype)


def _mlp_kernel_hidden_tiled(x_ref, w1_ref, b1_ref, w2_ref, b2_ref, o_ref, acc_ref):
    """Hidden-dim (K)-tiled fused MLP for weights too large to keep VMEM-resident.

    grid = (batch tiles, hidden tiles); the hidden axis is a reduction ("arbitrary"),
    accumulated in an f32 VMEM scratch, finalized (bias + cast) on the last hidden step.
    """
    h_idx = pl.program_id(1)

    @pl.when(h_idx == 0)
    def _():
        acc_ref[...] = jnp.zeros_like(acc_ref)

    h = jnp.dot(x_ref[...], w1_ref[...], preferred_element_type=jnp.float32) + b1_ref[...]
    h = jnp.maximum(h, 0.0).astype(w2_ref.dtype)
    acc_ref[...] += jnp.dot(h, w2_ref[...], preferred_element_type=jnp.float32)

    @pl.when(h_idx == pl.num_programs(1) - 1)
    def _():
        o_ref[...] = (acc_ref[...] + b2_ref[...]).astype(o_ref.dtype)


# ----------------------------------------------------------------------------
# Wrapper helpers
# ----------------------------------------------------------------------------
def _round_up(n, m):
    return ((n + m - 1) // m) * m


def _pad_axis(a, axis, multiple):
    """Zero-pad `axis` of `a` up to the next multiple of `multiple` (numerically inert)."""
    pad = (-a.shape[axis]) % multiple
    if pad == 0:
        return a
    widths = [(0, 0)] * a.ndim
    widths[axis] = (0, pad)
    return jnp.pad(a, widths)


def _pick_tm(B, max_tm):
    # Keep >= 2 grid steps whenever possible so both v7x TensorCores get work; 512-1024
    # row tiles reach ~85% of HBM roofline per measured Pallas tiling data.
    tm = min(max_tm, _round_up(pl.cdiv(B, 2), _SUBLANE))
    return max(tm, _SUBLANE)


def _stationary_spec(block_shape, index_map, single_buffer):
    if single_buffer:
        # Constant-index operands do not need double buffering; halves their VMEM use.
        return pl.BlockSpec(block_shape, index_map, pipeline_mode=pl.Buffered(1))
    return pl.BlockSpec(block_shape, index_map)


def _call_no_grid(xp, w1p, b1p, w2p, b2p, out_dtype):
    B = xp.shape[0]
    Dp_out = w2p.shape[1]
    vmem = pl.BlockSpec(memory_space=pltpu.MemorySpace.VMEM)
    return pl.pallas_call(
        _mlp_kernel,
        out_shape=jax.ShapeDtypeStruct((B, Dp_out), out_dtype),
        in_specs=[vmem, vmem, vmem, vmem, vmem],
        out_specs=vmem,
        compiler_params=pltpu.CompilerParams(vmem_limit_bytes=_VMEM_LIMIT),
    )(xp, w1p, b1p, w2p, b2p)


def _call_weight_stationary(xp, w1p, b1p, w2p, b2p, out_dtype, max_tm):
    B = xp.shape[0]
    Dp_in, Hp = w1p.shape
    Dp_out = w2p.shape[1]
    tm = _pick_tm(B, max_tm)
    # No extra pad-to-tm copy of x: Pallas handles the ragged last block (OOB rows are
    # per-row-independent garbage whose output rows are discarded/masked).
    grid = (pl.cdiv(B, tm),)

    def build(single_buffer):
        return pl.pallas_call(
            _mlp_kernel,
            out_shape=jax.ShapeDtypeStruct((B, Dp_out), out_dtype),
            grid=grid,
            in_specs=[
                pl.BlockSpec((tm, Dp_in), lambda i: (i, 0)),                    # x streams
                _stationary_spec((Dp_in, Hp), lambda i: (0, 0), single_buffer),  # w1 stays
                _stationary_spec((1, Hp), lambda i: (0, 0), single_buffer),      # b1 stays
                _stationary_spec((Hp, Dp_out), lambda i: (0, 0), single_buffer),  # w2 stays
                _stationary_spec((1, Dp_out), lambda i: (0, 0), single_buffer),   # b2 stays
            ],
            out_specs=pl.BlockSpec((tm, Dp_out), lambda i: (i, 0)),
            compiler_params=pltpu.CompilerParams(
                dimension_semantics=("parallel",),   # batch axis shards across v7x's 2 TCs
                vmem_limit_bytes=_VMEM_LIMIT,
            ),
        )(xp, w1p, b1p, w2p, b2p)

    try:
        return build(single_buffer=True)
    except Exception:  # fallback for jax builds without pipeline_mode=pl.Buffered(1)
        return build(single_buffer=False)


def _call_hidden_tiled(xp, w1p, b1p, w2p, b2p, out_dtype, max_tm):
    B = xp.shape[0]
    Dp_in, Hp = w1p.shape
    Dp_out = w2p.shape[1]
    # Hidden tile must exactly divide Hp (already a multiple of 128) so no garbage
    # columns/rows leak into the accumulator.
    th = next(t for t in (1024, 512, 256, 128) if Hp % t == 0)
    tm = min(_pick_tm(B, max_tm), 512)
    grid = (pl.cdiv(B, tm), Hp // th)

    return pl.pallas_call(
        _mlp_kernel_hidden_tiled,
        out_shape=jax.ShapeDtypeStruct((B, Dp_out), out_dtype),
        grid=grid,
        in_specs=[
            pl.BlockSpec((tm, Dp_in), lambda i, h: (i, 0)),
            pl.BlockSpec((Dp_in, th), lambda i, h: (0, h)),
            pl.BlockSpec((1, th), lambda i, h: (0, h)),
            pl.BlockSpec((th, Dp_out), lambda i, h: (h, 0)),
            pl.BlockSpec((1, Dp_out), lambda i, h: (0, 0)),
        ],
        out_specs=pl.BlockSpec((tm, Dp_out), lambda i, h: (i, 0)),
        scratch_shapes=[pltpu.VMEM((tm, Dp_out), jnp.float32)],
        compiler_params=pltpu.CompilerParams(
            dimension_semantics=("parallel", "arbitrary"),
            vmem_limit_bytes=_VMEM_LIMIT,
        ),
    )(xp, w1p, b1p, w2p, b2p)


def mlp_forward_pallas(x, w1, b1, w2, b2, *, use_bf16=True, out_dtype=None,
                       max_tm=1024, force_path=None):
    """Fused MLP forward with path selection:

      * "no_grid"          : whole problem VMEM-resident, zero per-step overhead.
      * "weight_stationary": batch-tiled grid, weights/biases VMEM-resident (1 buffer).
      * "hidden_tiled"     : K(hidden)-tiled reduction for weights too big for VMEM.

    Feature dims are zero-padded to multiples of 128 (lane-dense, unmasked stores);
    padding is numerically inert and sliced off at the end.
    """
    B, _ = x.shape
    d_out = w2.shape[1]
    if out_dtype is None:
        out_dtype = x.dtype   # keep caller dtype; pass jnp.bfloat16 to cut y write traffic

    xp = _pad_axis(x, 1, _LANE)
    w1p = _pad_axis(_pad_axis(w1, 0, _LANE), 1, _LANE)
    b1p = _pad_axis(b1, 1, _LANE)
    w2p = _pad_axis(_pad_axis(w2, 0, _LANE), 1, _LANE)
    b2p = _pad_axis(b2, 1, _LANE)

    # Pre-cast matmul operands BEFORE pallas_call: this is what halves HBM->VMEM DMA
    # bytes (BlockSpec DMAs the stored dtype).  Weights are typically already bf16
    # (cast once at module init) so this is a no-op for them; biases stay f32.
    mxu_dtype = jnp.bfloat16 if use_bf16 else jnp.float32
    xp = xp.astype(mxu_dtype)
    w1p = w1p.astype(mxu_dtype)
    w2p = w2p.astype(mxu_dtype)
    b1p = b1p.astype(jnp.float32)
    b2p = b2p.astype(jnp.float32)

    Dp_in, Hp = w1p.shape
    Dp_out = w2p.shape[1]

    isz = jnp.dtype(mxu_dtype).itemsize
    weight_bytes = (w1p.size + w2p.size) * isz + (b1p.size + b2p.size) * 4
    whole_bytes = (weight_bytes + xp.size * isz
                   + B * Hp * 4
                   + B * Dp_out * jnp.dtype(out_dtype).itemsize)

    if force_path is not None:
        path = force_path
    elif whole_bytes <= _NO_GRID_BYTES and B <= _NO_GRID_MAX_BATCH:
        path = "no_grid"
    elif weight_bytes <= _RESIDENT_WEIGHT_BYTES:
        path = "weight_stationary"
    else:
        path = "hidden_tiled"

    if path == "no_grid":
        yp = _call_no_grid(xp, w1p, b1p, w2p, b2p, out_dtype)
    elif path == "weight_stationary":
        yp = _call_weight_stationary(xp, w1p, b1p, w2p, b2p, out_dtype, max_tm)
    else:
        yp = _call_hidden_tiled(xp, w1p, b1p, w2p, b2p, out_dtype, max_tm)

    return yp[:B, :d_out]


# ----------------------------------------------------------------------------
# Representative "user module" (what would be wrapped by ORTModule)
# ----------------------------------------------------------------------------
class SimpleMLPModule:
    """A small 2-layer MLP whose forward runs in the fused Pallas kernels above."""

    def __init__(self, d_in, d_hidden, d_out, key, use_bf16=True):
        k1, k2, k3, k4 = jax.random.split(key, 4)
        w_dtype = jnp.bfloat16 if use_bf16 else jnp.float32
        # Weights stored (cast once) in the MXU dtype -> no per-forward cast traffic.
        self.w1 = (jax.random.normal(k1, (d_in, d_hidden), jnp.float32) * 0.05).astype(w_dtype)
        self.b1 = jax.random.normal(k2, (1, d_hidden), jnp.float32) * 0.01
        self.w2 = (jax.random.normal(k3, (d_hidden, d_out), jnp.float32) * 0.05).astype(w_dtype)
        self.b2 = jax.random.normal(k4, (1, d_out), jnp.float32) * 0.01
        self.use_bf16 = use_bf16
        self.training = True

    def forward(self, x):
        return mlp_forward_pallas(x, self.w1, self.b1, self.w2, self.b2,
                                  use_bf16=self.use_bf16)

    def parameters(self):
        yield from (self.w1, self.b1, self.w2, self.b2)

    def named_parameters(self, prefix=""):
        yield from ((prefix + n, p) for n, p in
                    [("w1", self.w1), ("b1", self.b1),
                     ("w2", self.w2), ("b2", self.b2)])

    def train(self, mode=True):
        self.training = mode
        return self


# ----------------------------------------------------------------------------
# ORTModule equivalent: a wrapper delegating forward to the inner module.
# The ONNX export / gradient-graph / InferenceSession machinery does not change
# forward numerics, so the semantics are "return exactly the wrapped forward".
# ----------------------------------------------------------------------------
class ORTModuleJax:
    def __init__(self, module):
        self._is_initialized = False
        self._torch_module = module  # here: the JAX/Pallas-backed user module

        def _forward(self, *inputs, **kwargs):
            # Forward pass delegated to the wrapped module (Pallas kernels inside).
            return self._torch_module.forward(*inputs, **kwargs)

        self.forward = _forward.__get__(self)
        functools.update_wrapper(self.forward.__func__, module.forward)
        self._is_initialized = True
        # TODO(synk): ONNX export, gradient-graph build and InferenceSession setup have
        # no Pallas equivalent; they do not affect forward numerics and are omitted.

    @property
    def module(self):
        return self._torch_module

    def parameters(self, recurse=True):
        yield from self._torch_module.parameters()

    def named_parameters(self, prefix="", recurse=True):
        yield from self._torch_module.named_parameters(prefix=prefix)

    def train(self, mode=True):
        self.training = mode
        self._torch_module.train(mode)
        return self

    def __call__(self, *inputs, **kwargs):
        return self.forward(*inputs, **kwargs)


# ----------------------------------------------------------------------------
# Reference (same bf16-input / f32-accumulate contraction as the kernel)
# ----------------------------------------------------------------------------
def _ref_forward(x, w1, b1, w2, b2, use_bf16=True):
    cast = (lambda a: a.astype(jnp.bfloat16)) if use_bf16 else (lambda a: a)
    h = jnp.dot(cast(x), cast(w1), preferred_element_type=jnp.float32) + b1.astype(jnp.float32)
    h = jnp.maximum(h, 0.0)
    return (jnp.dot(cast(h), cast(w2), preferred_element_type=jnp.float32)
            + b2.astype(jnp.float32))


# ----------------------------------------------------------------------------
# Main
# ----------------------------------------------------------------------------
if __name__ == "__main__":
    key = jax.random.PRNGKey(0)
    k_param, k_in_small, k_in_big = jax.random.split(key, 3)

    # Lane-dense small shapes (feature dims are multiples of 128 -> no padding needed).
    batch, d_in, d_hidden, d_out = 8, 128, 256, 128

    inner = SimpleMLPModule(d_in, d_hidden, d_out, k_param, use_bf16=True)
    ort_module = ORTModuleJax(inner)

    # --- small batch: single no-grid call, whole problem VMEM-resident -------
    x_small = jax.random.normal(k_in_small, (batch, d_in), jnp.float32)
    y_small = jax.block_until_ready(ort_module(x_small))
    ref_small = _ref_forward(x_small, inner.w1, inner.b1, inner.w2, inner.b2)
    assert y_small.shape == (batch, d_out)
    assert jnp.allclose(y_small, ref_small, atol=3e-3, rtol=3e-3)

    # --- large batch: batch-tiled, weight-stationary, 'parallel' axis --------
    big_batch = 2048
    x_big = jax.random.normal(k_in_big, (big_batch, d_in), jnp.float32)
    y_big = jax.block_until_ready(ort_module(x_big))
    ref_big = _ref_forward(x_big, inner.w1, inner.b1, inner.w2, inner.b2)
    assert y_big.shape == (big_batch, d_out)
    assert jnp.allclose(y_big, ref_big, atol=3e-3, rtol=3e-3)

    # --- exercise the K(hidden)-tiled fallback used when weights exceed VMEM -
    y_ht = jax.block_until_ready(
        mlp_forward_pallas(x_big, inner.w1, inner.b1, inner.w2, inner.b2,
                           use_bf16=True, force_path="hidden_tiled"))
    assert y_ht.shape == (big_batch, d_out)
    assert jnp.allclose(y_ht, ref_big, atol=3e-3, rtol=3e-3)

    print("KERNEL_OK")
</pallas_src>

<mosaic_0001>
module attributes {stable_mosaic.version = 11 : i64} {
  func.func @_mlp_kernel(%arg0: memref<8x128xbf16, #tpu.memory_space<vmem>>, %arg1: memref<128x256xbf16, #tpu.memory_space<vmem>>, %arg2: memref<1x256xf32, #tpu.memory_space<vmem>>, %arg3: memref<256x128xbf16, #tpu.memory_space<vmem>>, %arg4: memref<1x128xf32, #tpu.memory_space<vmem>>, %arg5: memref<8x128xf32, #tpu.memory_space<vmem>>) attributes {dimension_semantics = [], scalar_prefetch = 0 : i64, scratch_operands = 0 : i64, tpu.core_type = #tpu.core_type<tc>} {
    %c0 = arith.constant 0 : index
    %c0_0 = arith.constant 0 : index
    %0 = vector.load %arg0[%c0, %c0_0] : memref<8x128xbf16, #tpu.memory_space<vmem>>, vector<8x128xbf16>
    %c0_1 = arith.constant 0 : index
    %c0_2 = arith.constant 0 : index
    %1 = vector.load %arg1[%c0_1, %c0_2] : memref<128x256xbf16, #tpu.memory_space<vmem>>, vector<128x256xbf16>
    %cst = arith.constant dense<0.000000e+00> : vector<8x256xf32>
    %2 = tpu.matmul %0, %1, %cst {dimension_numbers = #tpu.dot_dimension_numbers<[1], [0], [0], [1], [0, 0, 1, 1], [], []>} : vector<8x128xbf16>, vector<128x256xbf16>, vector<8x256xf32> -> vector<8x256xf32>
    %c0_3 = arith.constant 0 : index
    %c0_4 = arith.constant 0 : index
    %3 = vector.load %arg2[%c0_3, %c0_4] : memref<1x256xf32, #tpu.memory_space<vmem>>, vector<1x256xf32>
    %4 = vector.broadcast %3 : vector<1x256xf32> to vector<8x256xf32>
    %5 = arith.addf %2, %4 : vector<8x256xf32>
    %cst_5 = arith.constant 0.000000e+00 : f32
    %6 = vector.broadcast %cst_5 : f32 to vector<8x256xf32>
    %7 = arith.maximumf %5, %6 : vector<8x256xf32>
    %8 = arith.truncf %7 : vector<8x256xf32> to vector<8x256xbf16>
    %c0_6 = arith.constant 0 : index
    %c0_7 = arith.constant 0 : index
    %9 = vector.load %arg3[%c0_6, %c0_7] : memref<256x128xbf16, #tpu.memory_space<vmem>>, vector<256x128xbf16>
    %cst_8 = arith.constant dense<0.000000e+00> : vector<8x128xf32>
    %10 = tpu.matmul %8, %9, %cst_8 {dimension_numbers = #tpu.dot_dimension_numbers<[1], [0], [0], [1], [0, 0, 1, 1], [], []>} : vector<8x256xbf16>, vector<256x128xbf16>, vector<8x128xf32> -> vector<8x128xf32>
    %c0_9 = arith.constant 0 : index
    %c0_10 = arith.constant 0 : index
    %11 = vector.load %arg4[%c0_9, %c0_10] : memref<1x128xf32, #tpu.memory_space<vmem>>, vector<1x128xf32>
    %12 = vector.broadcast %11 : vector<1x128xf32> to vector<8x128xf32>
    %13 = arith.addf %10, %12 : vector<8x128xf32>
    %c0_11 = arith.constant 0 : index
    %c0_12 = arith.constant 0 : index
    %14 = vector.load %arg5[%c0_11, %c0_12] : memref<8x128xf32, #tpu.memory_space<vmem>>, vector<8x128xf32>
    tpu.vector_store %arg5[%c0_11, %c0_12], %13 {strides = array<i32>} : memref<8x128xf32, #tpu.memory_space<vmem>>, vector<8x128xf32>,
    return
  }
}

</mosaic_0001>

<llo_original>
// kernel: tpu_custom_call.1
$region0: #{tpu_custom_call.1}
  #allocation0 [shape = 'u32[]', space=smem, size = 0x4, offset = 0x4, fixed_abs, tag = 'smem constant byte address 0x4 - core index']
  #allocation1 [shape = 'u32[144,128]{1,0:T(1,128)}', space=vmem, size = 0x12000, scoped, tag = 'internal scratch']
  %s0 = inlined_call_operand.hbm [shape: bf16[8,128], index: 0, kind: input, shape index: {}]
  %s1 = inlined_call_operand.hbm [shape: bf16[128,256], index: 1, kind: input, shape index: {}]
  %s2 = inlined_call_operand.vmem [shape: f32[1,256], index: 2, kind: input, shape index: {}]
  %s3 = inlined_call_operand.hbm [shape: bf16[256,128], index: 3, kind: input, shape index: {}]
  %s4 = inlined_call_operand.vmem [shape: f32[1,128], index: 4, kind: input, shape index: {}]
  %s5 = inlined_call_operand.hbm [shape: f32[8,128], index: 5, kind: output, shape index: {}]
  %s6 = sld [smem:[#allocation0]]
  $region42: #{tpu_custom_call.1} parent=0
    _
  %s8 = ssub.s32 1, %s6
  %s9 = scalar_select 0, %s8, %s6
  $region1: #{tpu_custom_call.1} parent=0
    #allocation2 [shape = 'u8[2048]{0}', space=vmem, size = 0x800, scoped, tag = 'input window, operand 0, single buffered']
    #allocation3 [shape = 's32[1]{0}', space=sflag, size = 0x4, scoped, tag = 'scoped memory for tpu_custom_call.1']
    #allocation4 [shape = 's32[1]{0}', space=sflag, size = 0x4, scoped, tag = 'scoped memory for tpu_custom_call.1']
    #allocation5 [shape = 'u8[65536]{0}', space=vmem, size = 0x10000, scoped, tag = 'input window, operand 1, single buffered']
    #allocation6 [shape = 's32[1]{0}', space=sflag, size = 0x4, scoped, tag = 'scoped memory for tpu_custom_call.1']
    #allocation7 [shape = 'u8[65536]{0}', space=vmem, size = 0x10000, scoped, tag = 'input window, operand 3, single buffered']
    #allocation8 [shape = 'u8[4096]{0}', space=vmem, size = 0x1000, scoped, tag = 'output window, operand 0, single buffered']
    %10 = vsyncpa [#allocation3], 0
    %11 = vsyncpa [#allocation6], 0
    %12 = vsyncpa [#allocation4], 0
    // Predicated region
    $region2: #{tpu_custom_call.1} parent=1 // pred_check
      _
    $region3: #{tpu_custom_call.1} parent=1 // pred_check_branch
      %14 = sbr.rel (0) target = $region5
    $region4: #{tpu_custom_call.1} parent=1 // pred_region
      %s16 = ssub.s32 64, 64
      %17 = vsyncadd [#allocation3], %s16
      %s19 = sshll.u32 [#allocation2], 4
      %s20 = int_to_ptr.vmem [resolvable:$true] %s19
      %22 = dma.hbm_to_vmem [thread:$0]  %s0, 64, %s20, [#allocation3]
    $region5: #{tpu_custom_call.1} parent=1 // pred_fallthru
      _
    // Predicated region
    $region6: #{tpu_custom_call.1} parent=1 // pred_check
      _
    $region7: #{tpu_custom_call.1} parent=1 // pred_check_branch
      %24 = sbr.rel (0) target = $region9
    $region8: #{tpu_custom_call.1} parent=1 // pred_region
      %s26 = ssub.s32 2048, 2048
      %27 = vsyncadd [#allocation6], %s26
      %s28 = sshll.u32 [#allocation5], 4
      %s29 = int_to_ptr.vmem [resolvable:$true] %s28
      %34 = dma.hbm_to_vmem [thread:$0]  %s1, 2048, %s29, [#allocation6], 128, 128, 8
    $region9: #{tpu_custom_call.1} parent=1 // pred_fallthru
      _
    // Predicated region
    $region10: #{tpu_custom_call.1} parent=1 // pred_check
      _
    $region11: #{tpu_custom_call.1} parent=1 // pred_check_branch
      %36 = sbr.rel (0) target = $region13
    $region12: #{tpu_custom_call.1} parent=1 // pred_region
      _
    $region13: #{tpu_custom_call.1} parent=1 // pred_fallthru
      _
    // Predicated region
    $region14: #{tpu_custom_call.1} parent=1 // pred_check
      _
    $region15: #{tpu_custom_call.1} parent=1 // pred_check_branch
      %38 = sbr.rel (0) target = $region17
    $region16: #{tpu_custom_call.1} parent=1 // pred_region
      %s40 = ssub.s32 2048, 2048
      %41 = vsyncadd [#allocation6], %s40
      %s42 = sshll.u32 [#allocation7], 4
      %s43 = int_to_ptr.vmem [resolvable:$true] %s42
      %48 = dma.hbm_to_vmem [thread:$0]  %s3, 2048, %s43, [#allocation6], 64, 64, 4
    $region17: #{tpu_custom_call.1} parent=1 // pred_fallthru
      _
    // Predicated region
    $region18: #{tpu_custom_call.1} parent=1 // pred_check
      _
    $region19: #{tpu_custom_call.1} parent=1 // pred_check_branch
      %50 = sbr.rel (0) target = $region21
    $region20: #{tpu_custom_call.1} parent=1 // pred_region
      _
    $region21: #{tpu_custom_call.1} parent=1 // pred_fallthru
      _
    // Predicated region
    $region22: #{tpu_custom_call.1} parent=1 // pred_check
      _
    $region23: #{tpu_custom_call.1} parent=1 // pred_check_branch
      %52 = sbr.rel (0) target = $region25
    $region24: #{tpu_custom_call.1} parent=1 // pred_region
      %53 = dma.done [#allocation3], 64
    $region25: #{tpu_custom_call.1} parent=1 // pred_fallthru
      _
    // Predicated region
    $region26: #{tpu_custom_call.1} parent=1 // pred_check
      _
    $region27: #{tpu_custom_call.1} parent=1 // pred_check_branch
      %55 = sbr.rel (0) target = $region29
    $region28: #{tpu_custom_call.1} parent=1 // pred_region
      %56 = dma.done [#allocation6], 2048
    $region29: #{tpu_custom_call.1} parent=1 // pred_fallthru
      _
    // Predicated region
    $region30: #{tpu_custom_call.1} parent=1 // pred_check
      _
    $region31: #{tpu_custom_call.1} parent=1 // pred_check_branch
      %58 = sbr.rel (0) target = $region33
    $region32: #{tpu_custom_call.1} parent=1 // pred_region
      %59 = dma.done [#allocation6], 2048
    $region33: #{tpu_custom_call.1} parent=1 // pred_fallthru
      _
    %v61 = vld [vmem:[#allocation2] sm:$0xf]
    %v62 = vld [vmem:[#allocation5] sm:$0xff]
    %v63 = vld [vmem:[#allocation5 + $0x8] sm:$0xff]
    %v64 = vld [vmem:[#allocation5 + $0x10] sm:$0xff]
    %v65 = vld [vmem:[#allocation5 + $0x18] sm:$0xff]
    %v66 = vld [vmem:[#allocation5 + $0x20] sm:$0xff]
    %v67 = vld [vmem:[#allocation5 + $0x28] sm:$0xff]
    %v68 = vld [vmem:[#allocation5 + $0x30] sm:$0xff]
    %v69 = vld [vmem:[#allocation5 + $0x38] sm:$0xff]
    %v70 = vld [vmem:[#allocation5 + $0x40] sm:$0xff]
    %v71 = vld [vmem:[#allocation5 + $0x48] sm:$0xff]
    %v72 = vld [vmem:[#allocation5 + $0x50] sm:$0xff]
    %v73 = vld [vmem:[#allocation5 + $0x58] sm:$0xff]
    %v74 = vld [vmem:[#allocation5 + $0x60] sm:$0xff]
    %v75 = vld [vmem:[#allocation5 + $0x68] sm:$0xff]
    %v76 = vld [vmem:[#allocation5 + $0x70] sm:$0xff]
    %v77 = vld [vmem:[#allocation5 + $0x78] sm:$0xff]
    %v78 = vld [vmem:[%s2] sm:$0x3]
    %v80 = vlaneseq
    %v81 = vshrl.u32 %v80, 7
    %v82 = vsub.s32 0, %v81
    %v83 = vrot.slane %v78, %v82
    %v84 = vlaneseq
    %v85 = vshrl.u32 %v84, 7
    %v86 = vsub.s32 1, %v85
    %v87 = vrot.slane %v78, %v86
    %v106 = vunpack.c.l.b16 %v62
    %v107 = vunpack.c.h.b16 %v62
    %v108 = vunpack.c.l.b16 %v63
    %v109 = vunpack.c.h.b16 %v63
    %v110 = vunpack.c.l.b16 %v64
    %v111 = vunpack.c.h.b16 %v64
    %v112 = vunpack.c.l.b16 %v65
    %v113 = vunpack.c.h.b16 %v65
    %v114 = vunpack.c.l.b16 %v66
    %v115 = vunpack.c.h.b16 %v66
    %v116 = vunpack.c.l.b16 %v67
    %v117 = vunpack.c.h.b16 %v67
    %v118 = vunpack.c.l.b16 %v68
    %v119 = vunpack.c.h.b16 %v68
    %v120 = vunpack.c.l.b16 %v69
    %v121 = vunpack.c.h.b16 %v69
    %v122 = vunpack.c.l.b16 %v70
    %v123 = vunpack.c.h.b16 %v70
    %v124 = vunpack.c.l.b16 %v71
    %v125 = vunpack.c.h.b16 %v71
    %v126 = vunpack.c.l.b16 %v72
    %v127 = vunpack.c.h.b16 %v72
    %v128 = vunpack.c.l.b16 %v73
    %v129 = vunpack.c.h.b16 %v73
    %v130 = vunpack.c.l.b16 %v74
    %v131 = vunpack.c.h.b16 %v74
    %v132 = vunpack.c.l.b16 %v75
    %v133 = vunpack.c.h.b16 %v75
    %v134 = vunpack.c.l.b16 %v76
    %v135 = vunpack.c.h.b16 %v76
    %v136 = vunpack.c.l.b16 %v77
    %v137 = vunpack.c.h.b16 %v77
    %v138 = vpack.c.b16 %v108, %v106
    %v139 = vpack.c.b16 %v109, %v107
    %v140 = vpack.c.b16 %v112, %v110
    %v141 = vpack.c.b16 %v113, %v111
    %v142 = vpack.c.b16 %v116, %v114
    %v143 = vpack.c.b16 %v117, %v115
    %v144 = vpack.c.b16 %v120, %v118
    %v145 = vpack.c.b16 %v121, %v119
    %v146 = vpack.c.b16 %v124, %v122
    %v147 = vpack.c.b16 %v125, %v123
    %v148 = vpack.c.b16 %v128, %v126
    %v149 = vpack.c.b16 %v129, %v127
    %v150 = vpack.c.b16 %v132, %v130
    %v151 = vpack.c.b16 %v133, %v131
    %v152 = vpack.c.b16 %v136, %v134
    %v153 = vpack.c.b16 %v137, %v135
    %170 = vmatprep.subr.bf16.mxu0 %v153
    %171 = vmatpush1.bf16.msra.mxu0 %v152
    %172 = vmatprep.subr.bf16.mxu0 %v151
    %173 = vmatpush1.bf16.msra.mxu0 %v150
    %174 = vmatprep.subr.bf16.mxu0 %v149
    %175 = vmatpush1.bf16.msra.mxu0 %v148
    %176 = vmatprep.subr.bf16.mxu0 %v147
    %177 = vmatpush1.bf16.msra.mxu0 %v146
    %178 = vmatprep.subr.bf16.mxu0 %v145
    %179 = vmatpush1.bf16.msra.mxu0 %v144
    %180 = vmatprep.subr.bf16.mxu0 %v143
    %181 = vmatpush1.bf16.msra.mxu0 %v142
    %182 = vmatprep.subr.bf16.mxu0 %v141
    %183 = vmatpush1.bf16.msra.mxu0 %v140
    %184 = vmatprep.subr.bf16.mxu0 %v139
    %185 = vmatpush1.bf16.msra.mxu0 %v138
    %186 = vmatprep.subr.bf16.mxu0 0
    %187 = vmatpush2.bf16.msra.mxu0 0
    %188 = vmatprep.subr.bf16.mxu0 0
    %189 = vmatpush2.bf16.msra.mxu0 0
    %190 = vmatprep.subr.bf16.mxu0 0
    %191 = vmatpush2.bf16.msra.mxu0 0
    %192 = vmatprep.subr.bf16.mxu0 0
    %193 = vmatpush2.bf16.msra.mxu0 0
    %194 = vmatprep.subr.bf16.mxu0 0
    %195 = vmatpush2.bf16.msra.mxu0 0
    %196 = vmatprep.subr.bf16.mxu0 0
    %197 = vmatpush2.bf16.msra.mxu0 0
    %198 = vmatprep.subr.bf16.mxu0 0
    %199 = vmatpush2.bf16.msra.mxu0 0
    %200 = vmatprep.subr.bf16.mxu0 0
    %201 = vmatpush2.bf16.msra.mxu0 0
    %202 = vmatprep.mubr.bf16.mxu0 0
    %203 = vmatmul.mubr.bf16.gmra.mxu0 %v61
    %v204 = vpop.f32.mrf.mxu0
    %v205 = vadd.f32 %v83, %v204
    %v206 = vpop.f32.mrf.mxu0
    %v207 = vadd.f32 %v87, %v206
    %v208 = vpop.f32.mrf.mxu0
    %v209 = vpop.f32.mrf.mxu0
    %210 = vdwg.mxu0
    %v211 = vmax.f32 %v205, 0.0
    %v212 = vmax.f32 %v207, 0.0
    %v213 = vpack.c.bf16 %v211, %v211
    %v214 = vpack.c.bf16 %v212, %v212
    %v215 = vld [vmem:[#allocation7] sm:$0xf]
    %v216 = vld [vmem:[#allocation7 + $0x4] sm:$0xf]
    %v217 = vld [vmem:[#allocation7 + $0x8] sm:$0xf]
    %v218 = vld [vmem:[#allocation7 + $0xc] sm:$0xf]
    %v219 = vld [vmem:[#allocation7 + $0x10] sm:$0xf]
    %v220 = vld [vmem:[#allocation7 + $0x14] sm:$0xf]
    %v221 = vld [vmem:[#allocation7 + $0x18] sm:$0xf]
    %v222 = vld [vmem:[#allocation7 + $0x1c] sm:$0xf]
    %v223 = vld [vmem:[#allocation7 + $0x20] sm:$0xf]
    %v224 = vld [vmem:[#allocation7 + $0x24] sm:$0xf]
    %v225 = vld [vmem:[#allocation7 + $0x28] sm:$0xf]
    %v226 = vld [vmem:[#allocation7 + $0x2c] sm:$0xf]
    %v227 = vld [vmem:[#allocation7 + $0x30] sm:$0xf]
    %v228 = vld [vmem:[#allocation7 + $0x34] sm:$0xf]
    %v229 = vld [vmem:[#allocation7 + $0x38] sm:$0xf]
    %v230 = vld [vmem:[#allocation7 + $0x3c] sm:$0xf]
    %v231 = vld [vmem:[#allocation7 + $0x40] sm:$0xf]
    %v232 = vld [vmem:[#allocation7 + $0x44] sm:$0xf]
    %v233 = vld [vmem:[#allocation7 + $0x48] sm:$0xf]
    %v234 = vld [vmem:[#allocation7 + $0x4c] sm:$0xf]
    %v235 = vld [vmem:[#allocation7 + $0x50] sm:$0xf]
    %v236 = vld [vmem:[#allocation7 + $0x54] sm:$0xf]
    %v237 = vld [vmem:[#allocation7 + $0x58] sm:$0xf]
    %v238 = vld [vmem:[#allocation7 + $0x5c] sm:$0xf]
    %v239 = vld [vmem:[#allocation7 + $0x60] sm:$0xf]
    %v240 = vld [vmem:[#allocation7 + $0x64] sm:$0xf]
    %v241 = vld [vmem:[#allocation7 + $0x68] sm:$0xf]
    %v242 = vld [vmem:[#allocation7 + $0x6c] sm:$0xf]
    %v243 = vld [vmem:[#allocation7 + $0x70] sm:$0xf]
    %v244 = vld [vmem:[#allocation7 + $0x74] sm:$0xf]
    %v245 = vld [vmem:[#allocation7 + $0x78] sm:$0xf]
    %v246 = vld [vmem:[#allocation7 + $0x7c] sm:$0xf]
    %v247 = vld [vmem:[%s4] sm:$0x1]
    %v249 = vlaneseq
    %v250 = vshrl.u32 %v249, 7
    %v251 = vsub.s32 0, %v250
    %v252 = vrot.slane %v247, %v251
    %v286 = vunpack.c.l.b16 %v215
    %v287 = vunpack.c.l.b16 %v216
    %v288 = vunpack.c.l.b16 %v217
    %v289 = vunpack.c.l.b16 %v218
    %v290 = vunpack.c.l.b16 %v219
    %v291 = vunpack.c.l.b16 %v220
    %v292 = vunpack.c.l.b16 %v221
    %v293 = vunpack.c.l.b16 %v222
    %v294 = vunpack.c.l.b16 %v223
    %v295 = vunpack.c.l.b16 %v224
    %v296 = vunpack.c.l.b16 %v225
    %v297 = vunpack.c.l.b16 %v226
    %v298 = vunpack.c.l.b16 %v227
    %v299 = vunpack.c.l.b16 %v228
    %v300 = vunpack.c.l.b16 %v229
    %v301 = vunpack.c.l.b16 %v230
    %v302 = vunpack.c.l.b16 %v231
    %v303 = vunpack.c.l.b16 %v232
    %v304 = vunpack.c.l.b16 %v233
    %v305 = vunpack.c.l.b16 %v234
    %v306 = vunpack.c.l.b16 %v235
    %v307 = vunpack.c.l.b16 %v236
    %v308 = vunpack.c.l.b16 %v237
    %v309 = vunpack.c.l.b16 %v238
    %v310 = vunpack.c.l.b16 %v239
    %v311 = vunpack.c.l.b16 %v240
    %v312 = vunpack.c.l.b16 %v241
    %v313 = vunpack.c.l.b16 %v242
    %v314 = vunpack.c.l.b16 %v243
    %v315 = vunpack.c.l.b16 %v244
    %v316 = vunpack.c.l.b16 %v245
    %v317 = vunpack.c.l.b16 %v246
    %v318 = vpack.c.b16 %v287, %v286
    %v319 = vpack.c.b16 %v289, %v288
    %v320 = vpack.c.b16 %v291, %v290
    %v321 = vpack.c.b16 %v293, %v292
    %v322 = vpack.c.b16 %v295, %v294
    %v323 = vpack.c.b16 %v297, %v296
    %v324 = vpack.c.b16 %v299, %v298
    %v325 = vpack.c.b16 %v301, %v300
    %v326 = vpack.c.b16 %v303, %v302
    %v327 = vpack.c.b16 %v305, %v304
    %v328 = vpack.c.b16 %v307, %v306
    %v329 = vpack.c.b16 %v309, %v308
    %v330 = vpack.c.b16 %v311, %v310
    %v331 = vpack.c.b16 %v313, %v312
    %v332 = vpack.c.b16 %v315, %v314
    %v333 = vpack.c.b16 %v317, %v316
    %350 = vmatprep.subr.bf16.mxu0 0
    %351 = vmatpush1.bf16.msra.mxu0 %v325
    %352 = vmatprep.subr.bf16.mxu0 0
    %353 = vmatpush1.bf16.msra.mxu0 %v324
    %354 = vmatprep.subr.bf16.mxu0 0
    %355 = vmatpush1.bf16.msra.mxu0 %v323
    %356 = vmatprep.subr.bf16.mxu0 0
    %357 = vmatpush1.bf16.msra.mxu0 %v322
    %358 = vmatprep.subr.bf16.mxu0 0
    %359 = vmatpush1.bf16.msra.mxu0 %v321
    %360 = vmatprep.subr.bf16.mxu0 0
    %361 = vmatpush1.bf16.msra.mxu0 %v320
    %362 = vmatprep.subr.bf16.mxu0 0
    %363 = vmatpush1.bf16.msra.mxu0 %v319
    %364 = vmatprep.subr.bf16.mxu0 0
    %365 = vmatpush1.bf16.msra.mxu0 %v318
    %366 = vmatprep.subr.bf16.mxu0 0
    %367 = vmatpush2.bf16.msra.mxu0 %v333
    %368 = vmatprep.subr.bf16.mxu0 0
    %369 = vmatpush2.bf16.msra.mxu0 %v332
    %370 = vmatprep.subr.bf16.mxu0 0
    %371 = vmatpush2.bf16.msra.mxu0 %v331
    %372 = vmatprep.subr.bf16.mxu0 0
    %373 = vmatpush2.bf16.msra.mxu0 %v330
    %374 = vmatprep.subr.bf16.mxu0 0
    %375 = vmatpush2.bf16.msra.mxu0 %v329
    %376 = vmatprep.subr.bf16.mxu0 0
    %377 = vmatpush2.bf16.msra.mxu0 %v328
    %378 = vmatprep.subr.bf16.mxu0 0
    %379 = vmatpush2.bf16.msra.mxu0 %v327
    %380 = vmatprep.subr.bf16.mxu0 0
    %381 = vmatpush2.bf16.msra.mxu0 %v326
    %382 = vmatprep.mubr.bf16.mxu0 %v214
    %383 = vmatmul.mubr.bf16.gmra.mxu0 %v213
    %v384 = vpop.f32.mrf.mxu0
    %v385 = vadd.f32 %v252, %v384
    %v386 = vpop.f32.mrf.mxu0
    %v387 = vpop.f32.mrf.mxu0
    %v388 = vpop.f32.mrf.mxu0
    %389 = vdwg.mxu0
    %390 = vst [vmem:[#allocation8] sm:$0xff] %v385
    // Predicated region
    $region34: #{tpu_custom_call.1} parent=1 // pred_check
      _
    $region35: #{tpu_custom_call.1} parent=1 // pred_check_branch
      %392 = sbr.rel (0) target = $region37
    $region36: #{tpu_custom_call.1} parent=1 // pred_region
      %s394 = ssub.s32 128, 128
      %395 = vsyncadd [#allocation4], %s394
      %s397 = sshll.u32 [#allocation8], 4
      %s398 = int_to_ptr.vmem [resolvable:$true] %s397
      %400 = dma.vmem_to_hbm [thread:$0]  %s398, 128, %s5, [#allocation4]
    $region37: #{tpu_custom_call.1} parent=1 // pred_fallthru
      _
    // Predicated region
    $region38: #{tpu_custom_call.1} parent=1 // pred_check
      _
    $region39: #{tpu_custom_call.1} parent=1 // pred_check_branch
      %402 = sbr.rel (0) target = $region41
    $region40: #{tpu_custom_call.1} parent=1 // pred_region
      %403 = dma.done [#allocation4], 128
    $region41: #{tpu_custom_call.1} parent=1 // pred_fallthru
      _
    %404 = vsyncpa [#allocation3], 1
    %405 = vsyncpa [#allocation6], 1
    %406 = vsyncpa [#allocation4], 1

</llo_original>
